<compile_context>
chip_gen: v5e
topology: v5e:2x2
jax: 0.10.0
libtpu: 0.0.40
codegen_flags: <defaults>
</compile_context>

<pallas_src>
import functools

import jax
import jax.numpy as jnp
from jax.experimental import pallas as pl
from jax.experimental.pallas import tpu as pltpu

LANES = 128
DEFAULT_TILE_R = 4096   # rows per tile: 2 MiB per f32 stream per buffer
V7X_TILE_R = 8192       # v7x: 4 MiB/stream/buffer = 16 MiB total, < 32 MiB scoped


def _round_up(v, m):
    return ((v + m - 1) // m) * m


def _sublane_multiple(dtype):
    # Minimum sublane tile: 8 rows (4-byte), 16 (2-byte, e.g. bf16), 32 (1-byte).
    return max(8, 32 // jnp.dtype(dtype).itemsize)


def _tensorcores_per_chip():
    # Only v7x has 2 TensorCores per chip; be conservative everywhere else.
    try:
        kind = jax.devices()[0].device_kind.lower()
    except Exception:
        return 1
    return 2 if "v7" in kind else 1


def _sce_loss_kernel(x_ref, t_ref, out_ref, acc_ref, *, total_count, tile_r,
                     inner_steps):
    p = pl.program_id(0)   # partition axis (TensorCores on v7x)
    i = pl.program_id(1)   # sequential reduction axis

    @pl.when(i == 0)
    def _():
        acc_ref[...] = jnp.zeros_like(acc_ref)

    x = x_ref[...].astype(jnp.float32)
    t = t_ref[...].astype(jnp.float32)

    # -x*target + clamp(x, min=0) + log(1 + exp(-|x|))  -- matches PyTorch.
    # log1p saves one VALU add per element and is more accurate near 0.
    val = jnp.maximum(x, 0.0) - x * t + jnp.log1p(jnp.exp(-jnp.abs(x)))

    # Flat element offset of this *logical* tile (int32: guarded < 2**31 elems).
    block_idx = p * inner_steps + i
    start_elem = block_idx * (tile_r * LANES)
    is_full = start_elem + tile_r * LANES <= total_count

    @pl.when(is_full)
    def _():
        # (tile_r,128) -> (tile_r//8, 8, 128): each group is one native vreg
        # tile, so the reshape is free and the sum is pure VALU vreg adds.
        acc_ref[...] += val.reshape(tile_r // 8, 8, LANES).sum(axis=0)

    @pl.when(jnp.logical_not(is_full))
    def _():
        # Last (or clamped, fully-out-of-range) tile: mask padding / OOB elems.
        r_ids = jax.lax.broadcasted_iota(jnp.int32, (tile_r, LANES), 0)
        c_ids = jax.lax.broadcasted_iota(jnp.int32, (tile_r, LANES), 1)
        flat = start_elem + r_ids * LANES + c_ids
        masked = jnp.where(flat < total_count, val, 0.0)
        acc_ref[...] += masked.reshape(tile_r // 8, 8, LANES).sum(axis=0)

    @pl.when(i == pl.num_programs(1) - 1)
    def _():
        # Single small cross-lane reduction per partition; mean + abs done in
        # the wrapper after combining partitions.
        out_ref[0, 0] = jnp.sum(acc_ref[...])


def sigmoid_cross_entropy_loss(x, target, *, tile_r=None):
    """Exact equivalent of SigmoidCrossEntropyLoss.forward (scalar f32)."""
    assert x.shape == target.shape
    total = int(x.size)
    # int32 flat-index tail masking: guard against silent overflow.
    assert 0 < total < 2 ** 31, "inputs with >= 2**31 elements not supported"

    n_cores = _tensorcores_per_chip()
    if tile_r is None:
        tile_r = V7X_TILE_R if n_cores >= 2 else DEFAULT_TILE_R

    xf = jnp.reshape(x, (-1,))
    tf = jnp.reshape(target, (-1,))

    # Pad only when the element count is not already lane (128) aligned.
    pad = (-total) % LANES
    if pad:
        xf = jnp.pad(xf, (0, pad))
        tf = jnp.pad(tf, (0, pad))
    rows = (total + pad) // LANES

    mult = max(_sublane_multiple(x.dtype), _sublane_multiple(target.dtype))
    tile_r = max(mult, min(_round_up(tile_r, mult), _round_up(rows, mult)))

    x2 = xf.reshape(rows, LANES)
    t2 = tf.reshape(rows, LANES)

    n_blocks = -(-rows // tile_r)
    # 2-way split only where it is real (2 TensorCores); on v5e/v6e a split is
    # just a serial loop + a wasted overhang tile, so keep n_par = 1 there.
    n_par = n_cores if (n_cores >= 2 and n_blocks >= 2) else 1
    inner = -(-n_blocks // n_par)

    def in_map(p, i):
        # Clamp so the (fully masked) overhang tiles of an uneven split never
        # address a block past the array; those tiles contribute exactly 0.
        return (jnp.minimum(p * inner + i, n_blocks - 1), 0)

    block = pl.BlockSpec((tile_r, LANES), in_map)

    kernel = functools.partial(
        _sce_loss_kernel, total_count=total, tile_r=tile_r, inner_steps=inner)

    core_parallel = getattr(pltpu, "CORE_PARALLEL", None)
    if n_par >= 2 and core_parallel is not None:
        dims = (core_parallel, getattr(pltpu, "ARBITRARY", "arbitrary"))
    else:
        dims = ("arbitrary", "arbitrary")

    partials = pl.pallas_call(
        kernel,
        out_shape=jax.ShapeDtypeStruct((n_par, 1), jnp.float32),
        grid_spec=pltpu.PrefetchScalarGridSpec(
            num_scalar_prefetch=0,
            grid=(n_par, inner),
            in_specs=[block, block],
            out_specs=pl.BlockSpec((1, 1), lambda p, i: (p, 0),
                                   memory_space=pltpu.SMEM),
            scratch_shapes=[pltpu.VMEM((8, LANES), jnp.float32)],
        ),
        compiler_params=pltpu.CompilerParams(dimension_semantics=dims),
    )(x2, t2)

    return jnp.abs(jnp.sum(partials) / jnp.float32(total))


def _reference(x, target):
    x = x.astype(jnp.float32)
    target = target.astype(jnp.float32)
    tmp = 1.0 + jnp.exp(-jnp.abs(x))
    return jnp.abs(
        jnp.mean(-x * target + jnp.clip(x, min=0.0) + jnp.log(tmp))
    )


if __name__ == "__main__":
    key = jax.random.PRNGKey(0)
    kx, kt = jax.random.split(key)
    # NCHW logits and binary targets, like the PyTorch module would receive.
    x = jax.random.normal(kx, (2, 4, 16, 16), dtype=jnp.float32)
    target = (
        jax.random.uniform(kt, (2, 4, 16, 16), dtype=jnp.float32) > 0.5
    ).astype(jnp.float32)

    loss = sigmoid_cross_entropy_loss(x, target)
    jax.block_until_ready(loss)

    ref = _reference(x, target)
    assert jnp.allclose(loss, ref, rtol=1e-5, atol=1e-6), (loss, ref)
    print("KERNEL_OK")
</pallas_src>

<mosaic_0001>
module attributes {stable_mosaic.version = 11 : i64} {
  func.func @_sce_loss_kernel(%arg0: i32, %arg1: i32, %arg2: memref<16x128xf32, #tpu.memory_space<vmem>>, %arg3: memref<16x128xf32, #tpu.memory_space<vmem>>, %arg4: memref<1x1xf32, #tpu.memory_space<smem>>, %arg5: memref<8x128xf32, #tpu.memory_space<vmem>>) attributes {dimension_semantics = [#tpu.dimension_semantics<arbitrary>, #tpu.dimension_semantics<arbitrary>], iteration_bounds = array<i64: 1, 1>, scalar_prefetch = 0 : i64, scratch_operands = 1 : i64, tpu.core_type = #tpu.core_type<tc>, window_params = [{transform_indices = @transform_0, window_bounds = array<i64: 16, 128>}, {transform_indices = @transform_1, window_bounds = array<i64: 16, 128>}, {transform_indices = @transform_2, window_bounds = array<i64: 1, 1>}]} {
    %c0_i32 = arith.constant 0 : i32
    %0 = arith.cmpi eq, %arg1, %c0_i32 : i32
    %1 = arith.extui %0 : i1 to i32
    %c0_i32_0 = arith.constant 0 : i32
    %2 = arith.cmpi ne, %1, %c0_i32_0 : i32
    scf.if %2 {
      %cst_11 = arith.constant 0.000000e+00 : f32
      %28 = vector.broadcast %cst_11 : f32 to vector<8x128xf32>
      %c0_12 = arith.constant 0 : index
      %c0_13 = arith.constant 0 : index
      %29 = vector.load %arg5[%c0_12, %c0_13] : memref<8x128xf32, #tpu.memory_space<vmem>>, vector<8x128xf32>
      tpu.vector_store %arg5[%c0_12, %c0_13], %28 {strides = array<i32>} : memref<8x128xf32, #tpu.memory_space<vmem>>, vector<8x128xf32>,
    } else {
    }
    %c0 = arith.constant 0 : index
    %c0_1 = arith.constant 0 : index
    %3 = vector.load %arg2[%c0, %c0_1] : memref<16x128xf32, #tpu.memory_space<vmem>>, vector<16x128xf32>
    %c0_2 = arith.constant 0 : index
    %c0_3 = arith.constant 0 : index
    %4 = vector.load %arg3[%c0_2, %c0_3] : memref<16x128xf32, #tpu.memory_space<vmem>>, vector<16x128xf32>
    %cst = arith.constant 0.000000e+00 : f32
    %5 = vector.broadcast %cst : f32 to vector<16x128xf32>
    %6 = arith.maximumf %3, %5 : vector<16x128xf32>
    %7 = arith.mulf %3, %4 : vector<16x128xf32>
    %8 = arith.subf %6, %7 : vector<16x128xf32>
    %9 = math.absf %3 : vector<16x128xf32>
    %cst_4 = arith.constant 0.000000e+00 : f32
    %10 = vector.broadcast %cst_4 : f32 to vector<16x128xf32>
    %11 = arith.subf %10, %9 : vector<16x128xf32>
    %12 = math.exp %11 : vector<16x128xf32>
    %13 = math.log1p %12 : vector<16x128xf32>
    %14 = arith.addf %8, %13 : vector<16x128xf32>
    %c1_i32 = arith.constant 1 : i32
    %15 = arith.muli %arg0, %c1_i32 : i32
    %16 = arith.addi %15, %arg1 : i32
    %c2048_i32 = arith.constant 2048 : i32
    %17 = arith.muli %16, %c2048_i32 : i32
    %c2048_i32_5 = arith.constant 2048 : i32
    %18 = arith.addi %17, %c2048_i32_5 : i32
    %c2048_i32_6 = arith.constant 2048 : i32
    %19 = arith.cmpi sle, %18, %c2048_i32_6 : i32
    %20 = arith.extui %19 : i1 to i32
    %c0_i32_7 = arith.constant 0 : i32
    %21 = arith.cmpi ne, %20, %c0_i32_7 : i32
    scf.if %21 {
      %c0_11 = arith.constant 0 : index
      %c0_12 = arith.constant 0 : index
      %28 = vector.load %arg5[%c0_11, %c0_12] : memref<8x128xf32, #tpu.memory_space<vmem>>, vector<8x128xf32>
      %29 = vector.shape_cast %14 : vector<16x128xf32> to vector<2x8x128xf32>
      %cst_13 = arith.constant dense<0.000000e+00> : vector<8x128xf32>
      %30 = vector.multi_reduction <add>, %29, %cst_13 [0] : vector<2x8x128xf32> to vector<8x128xf32>
      %31 = arith.addf %28, %30 : vector<8x128xf32>
      %c0_14 = arith.constant 0 : index
      %c0_15 = arith.constant 0 : index
      %32 = vector.load %arg5[%c0_14, %c0_15] : memref<8x128xf32, #tpu.memory_space<vmem>>, vector<8x128xf32>
      tpu.vector_store %arg5[%c0_14, %c0_15], %31 {strides = array<i32>} : memref<8x128xf32, #tpu.memory_space<vmem>>, vector<8x128xf32>,
    } else {
    }
    %true = arith.constant true
    %22 = arith.xori %19, %true : i1
    %23 = arith.extui %22 : i1 to i32
    %c0_i32_8 = arith.constant 0 : i32
    %24 = arith.cmpi ne, %23, %c0_i32_8 : i32
    scf.if %24 {
      %28 = tpu.iota {dimensions = array<i32: 0>} : vector<16x128xi32>
      %29 = tpu.iota {dimensions = array<i32: 1>} : vector<16x128xi32>
      %c128_i32 = arith.constant 128 : i32
      %30 = vector.broadcast %c128_i32 : i32 to vector<16x128xi32>
      %31 = arith.muli %28, %30 : vector<16x128xi32>
      %32 = vector.broadcast %17 : i32 to vector<16x128xi32>
      %33 = arith.addi %32, %31 : vector<16x128xi32>
      %34 = arith.addi %33, %29 : vector<16x128xi32>
      %c2048_i32_11 = arith.constant 2048 : i32
      %35 = vector.broadcast %c2048_i32_11 : i32 to vector<16x128xi32>
      %36 = arith.cmpi slt, %34, %35 : vector<16x128xi32>
      %cst_12 = arith.constant 0.000000e+00 : f32
      %37 = vector.broadcast %cst_12 : f32 to vector<16x128xf32>
      %38 = arith.select %36, %14, %37 : vector<16x128xi1>, vector<16x128xf32>
      %c0_13 = arith.constant 0 : index
      %c0_14 = arith.constant 0 : index
      %39 = vector.load %arg5[%c0_13, %c0_14] : memref<8x128xf32, #tpu.memory_space<vmem>>, vector<8x128xf32>
      %40 = vector.shape_cast %38 : vector<16x128xf32> to vector<2x8x128xf32>
      %cst_15 = arith.constant dense<0.000000e+00> : vector<8x128xf32>
      %41 = vector.multi_reduction <add>, %40, %cst_15 [0] : vector<2x8x128xf32> to vector<8x128xf32>
      %42 = arith.addf %39, %41 : vector<8x128xf32>
      %c0_16 = arith.constant 0 : index
      %c0_17 = arith.constant 0 : index
      %43 = vector.load %arg5[%c0_16, %c0_17] : memref<8x128xf32, #tpu.memory_space<vmem>>, vector<8x128xf32>
      tpu.vector_store %arg5[%c0_16, %c0_17], %42 {strides = array<i32>} : memref<8x128xf32, #tpu.memory_space<vmem>>, vector<8x128xf32>,
    } else {
    }
    %c0_i32_9 = arith.constant 0 : i32
    %25 = arith.cmpi eq, %arg1, %c0_i32_9 : i32
    %26 = arith.extui %25 : i1 to i32
    %c0_i32_10 = arith.constant 0 : i32
    %27 = arith.cmpi ne, %26, %c0_i32_10 : i32
    scf.if %27 {
      %c0_11 = arith.constant 0 : index
      %c0_12 = arith.constant 0 : index
      %28 = vector.load %arg5[%c0_11, %c0_12] : memref<8x128xf32, #tpu.memory_space<vmem>>, vector<8x128xf32>
      %29 = vector.shape_cast %28 : vector<8x128xf32> to vector<1x8x128xf32>
      %cst_13 = arith.constant dense<0.000000e+00> : vector<1xf32>
      %30 = vector.multi_reduction <add>, %29, %cst_13 [1, 2] : vector<1x8x128xf32> to vector<1xf32>
      %31 = vector.shape_cast %30 : vector<1xf32> to vector<1x1x1xf32>
      %32 = vector.extract %31[0, 0, 0] : f32 from vector<1x1x1xf32>
      %c0_14 = arith.constant 0 : index
      %c0_15 = arith.constant 0 : index
      %33 = memref.load %arg4[%c0_14, %c0_15] : memref<1x1xf32, #tpu.memory_space<smem>>
      memref.store %32, %arg4[%c0_14, %c0_15] : memref<1x1xf32, #tpu.memory_space<smem>>
    } else {
    }
    return
  }
  func.func @transform_0(%arg0: i32, %arg1: i32) -> (i32, i32) {
    %c1_i32 = arith.constant 1 : i32
    %0 = arith.muli %arg0, %c1_i32 : i32
    %1 = arith.addi %0, %arg1 : i32
    %c0_i32 = arith.constant 0 : i32
    %2 = arith.minsi %1, %c0_i32 : i32
    %c0_i32_0 = arith.constant 0 : i32
    %c0_i32_1 = arith.constant 0 : i32
    return %2, %c0_i32_0 : i32, i32
  }
  func.func @transform_1(%arg0: i32, %arg1: i32) -> (i32, i32) {
    %c1_i32 = arith.constant 1 : i32
    %0 = arith.muli %arg0, %c1_i32 : i32
    %1 = arith.addi %0, %arg1 : i32
    %c0_i32 = arith.constant 0 : i32
    %2 = arith.minsi %1, %c0_i32 : i32
    %c0_i32_0 = arith.constant 0 : i32
    %c0_i32_1 = arith.constant 0 : i32
    return %2, %c0_i32_0 : i32, i32
  }
  func.func @transform_2(%arg0: i32, %arg1: i32) -> (i32, i32) {
    %c0_i32 = arith.constant 0 : i32
    %c0_i32_0 = arith.constant 0 : i32
    return %arg0, %c0_i32 : i32, i32
  }
}

</mosaic_0001>

<llo_original>
// kernel: tpu_custom_call.1
$region0: #{tpu_custom_call.1}
  #allocation0 [shape = 'u32[]', space=smem, size = 0x4, offset = 0x4, fixed_abs, tag = 'smem constant byte address 0x4 - core index']
  #allocation1 [shape = 'u32[72,128]{1,0:T(1,128)}', space=vmem, size = 0x9000, scoped, tag = 'internal scratch']
  #allocation2 [shape = 'f32[8,128]{1,0:T(8,128)}', space=vmem, size = 0x1000, scoped, tag = 'scratch operand']
  %s0 = inlined_call_operand.hbm [shape: f32[16,128], index: 0, kind: input, shape index: {}]
  %s1 = inlined_call_operand.hbm [shape: f32[16,128], index: 1, kind: input, shape index: {}]
  %s2 = inlined_call_operand.hbm [shape: f32[1,1], index: 2, kind: output, shape index: {}]
  %s3 = sld [smem:[#allocation0]]
  $region42: #{tpu_custom_call.1} parent=0
    _
  %s5 = ssub.s32 1, %s3
  %s6 = scalar_select 0, %s5, %s3
  $region1: #{tpu_custom_call.1} parent=0
    #allocation3 [shape = 'u8[8192]{0}', space=vmem, size = 0x2000, scoped, tag = 'input window, operand 0, single buffered']
    #allocation4 [shape = 's32[1]{0}', space=sflag, size = 0x4, scoped, tag = 'scoped memory for tpu_custom_call.1']
    #allocation5 [shape = 's32[1]{0}', space=sflag, size = 0x4, scoped, tag = 'scoped memory for tpu_custom_call.1']
    #allocation6 [shape = 'u8[8192]{0}', space=vmem, size = 0x2000, scoped, tag = 'input window, operand 1, single buffered']
    #allocation7 [shape = 's32[1]{0}', space=sflag, size = 0x4, scoped, tag = 'scoped memory for tpu_custom_call.1']
    #allocation8 [shape = 'u8[512]{0}', space=smem, size = 0x200, scoped, tag = 'output window, operand 0, single buffered']
    %7 = vsyncpa [#allocation4], 0
    %8 = vsyncpa [#allocation7], 0
    %9 = vsyncpa [#allocation5], 0
    // Predicated region
    $region2: #{tpu_custom_call.1} parent=1 // pred_check
      _
    $region3: #{tpu_custom_call.1} parent=1 // pred_check_branch
      %11 = sbr.rel (0) target = $region5
    $region4: #{tpu_custom_call.1} parent=1 // pred_region
      %s12 = sadd.s32 0, 0
      %p13 = scmp.lt.s32.totalorder %s12, 0
      %s14 = scalar_select %p13, %s12, 0
      %s15 = smul.u32 2, %s14
      %17 = vsyncadd [#allocation4], 0
      %s18 = smul.addr %s15, 8
      %s19 = scalar_lea.hbm %s0, %s18
      %s20 = sshll.u32 %s19, 4
      %s21 = int_to_ptr.hbm [resolvable:$true] %s20
      %s22 = sshll.u32 [#allocation3], 4
      %s23 = int_to_ptr.vmem [resolvable:$true] %s22
      %28 = dma.hbm_to_vmem [thread:$0]  %s21, 256, %s23, [#allocation4], 128, 128, 8
    $region5: #{tpu_custom_call.1} parent=1 // pred_fallthru
      _
    // Predicated region
    $region6: #{tpu_custom_call.1} parent=1 // pred_check
      _
    $region7: #{tpu_custom_call.1} parent=1 // pred_check_branch
      %30 = sbr.rel (0) target = $region9
    $region8: #{tpu_custom_call.1} parent=1 // pred_region
      %s31 = sadd.s32 0, 0
      %p32 = scmp.lt.s32.totalorder %s31, 0
      %s33 = scalar_select %p32, %s31, 0
      %s34 = smul.u32 2, %s33
      %36 = vsyncadd [#allocation7], 0
      %s37 = smul.addr %s34, 8
      %s38 = scalar_lea.hbm %s1, %s37
      %s39 = sshll.u32 %s38, 4
      %s40 = int_to_ptr.hbm [resolvable:$true] %s39
      %s41 = sshll.u32 [#allocation6], 4
      %s42 = int_to_ptr.vmem [resolvable:$true] %s41
      %47 = dma.hbm_to_vmem [thread:$0]  %s40, 256, %s42, [#allocation7], 128, 128, 8
    $region9: #{tpu_custom_call.1} parent=1 // pred_fallthru
      _
    // Predicated region
    $region10: #{tpu_custom_call.1} parent=1 // pred_check
      _
    $region11: #{tpu_custom_call.1} parent=1 // pred_check_branch
      %49 = sbr.rel (0) target = $region13
    $region12: #{tpu_custom_call.1} parent=1 // pred_region
      %51 = dma.done [#allocation4], 256
    $region13: #{tpu_custom_call.1} parent=1 // pred_fallthru
      _
    // Predicated region
    $region14: #{tpu_custom_call.1} parent=1 // pred_check
      _
    $region15: #{tpu_custom_call.1} parent=1 // pred_check_branch
      %53 = sbr.rel (0) target = $region17
    $region16: #{tpu_custom_call.1} parent=1 // pred_region
      %55 = dma.done [#allocation7], 256
    $region17: #{tpu_custom_call.1} parent=1 // pred_fallthru
      _
    %s56 = sadd.s32 0, 0
    %p57 = scmp.lt.s32.totalorder %s56, 0
    %s58 = scalar_select %p57, %s56, 0
    %s59 = smul.u32 2, %s58
    %s60 = sadd.s32 0, 0
    %p61 = scmp.lt.s32.totalorder %s60, 0
    %s62 = scalar_select %p61, %s60, 0
    %s63 = smul.u32 2, %s62
    %p64 = scmp.eq.s32.totalorder 0, 0
    // Predicated region
    $region18: #{tpu_custom_call.1} parent=1 // pred_check
      %p65 = pneg %p64
    $region19: #{tpu_custom_call.1} parent=1 // pred_check_branch
      %67 = sbr.rel (%p65) target = $region21
    $region20: #{tpu_custom_call.1} parent=1 // pred_region
      %68 = vst [vmem:[#allocation2] sm:$0xff] 0.0
    $region21: #{tpu_custom_call.1} parent=1 // pred_fallthru
      _
    %v69 = vld [vmem:[#allocation3] sm:$0xff]
    %v70 = vld [vmem:[#allocation3 + $0x8] sm:$0xff]
    %v71 = vld [vmem:[#allocation6] sm:$0xff]
    %v72 = vld [vmem:[#allocation6 + $0x8] sm:$0xff]
    %v73 = vmax.f32 %v69, 0.0
    %v74 = vmax.f32 %v70, 0.0
    %v75 = vmul.f32 %v69, %v71
    %v76 = vmul.f32 %v70, %v72
    %v77 = vsub.f32 %v73, %v75
    %v78 = vsub.f32 %v74, %v76
    %v79 = vand.u32 2147483647, %v69
    %v80 = vand.u32 2147483647, %v70
    %v81 = vsub.f32 0.0, %v79
    %v82 = vsub.f32 0.0, %v80
    %v83 = vmul.f32 %v81, 1.442695
    %v84 = vpow.pop %v83
    %v85 = vmul.f32 %v82, 1.442695
    %v86 = vpow.pop %v85
    %v87 = vadd.f32 %v84, 1.0
    %v88 = vlog2.pop %v87
    %v89 = vmul.f32 %v88, 0.6931472
    %v90 = vmul.f32 -0.5, %v84
    %v91 = vadd.f32 %v90, 1.0
    %v92 = vmul.f32 %v91, %v84
    %v93 = vand.u32 2147483647, %v84
    %vm94 = vcmp.lt.f32.partialorder %v93, 0.0004427343
    %v95 = vsel %vm94, %v92, %v89
    %v96 = vadd.f32 %v86, 1.0
    %v97 = vlog2.pop %v96
    %v98 = vmul.f32 %v97, 0.6931472
    %v99 = vmul.f32 -0.5, %v86
    %v100 = vadd.f32 %v99, 1.0
    %v101 = vmul.f32 %v100, %v86
    %v102 = vand.u32 2147483647, %v86
    %vm103 = vcmp.lt.f32.partialorder %v102, 0.0004427343
    %v104 = vsel %vm103, %v101, %v98
    %v105 = vadd.f32 %v77, %v95
    %v106 = vadd.f32 %v78, %v104
    %s107 = sadd.s32 0, 0
    %s108 = smul.u32 %s107, 2048
    %s109 = sadd.s32 %s108, 2048
    %p110 = scmp.le.s32.totalorder %s109, 2048
    // Predicated region
    $region22: #{tpu_custom_call.1} parent=1 // pred_check
      %p111 = pneg %p110
    $region23: #{tpu_custom_call.1} parent=1 // pred_check_branch
      %113 = sbr.rel (%p111) target = $region25
    $region24: #{tpu_custom_call.1} parent=1 // pred_region
      %v114 = vld [vmem:[#allocation2] sm:$0xff]
      %v115 = vadd.f32 %v105, %v106
      %v116 = vadd.f32 %v114, %v115
      %117 = vst [vmem:[#allocation2] sm:$0xff] %v116
    $region25: #{tpu_custom_call.1} parent=1 // pred_fallthru
      _
    %p118 = scmp.gt.s32.totalorder %s109, 2048
    // Predicated region
    $region26: #{tpu_custom_call.1} parent=1 // pred_check
      %p119 = pneg %p118
    $region27: #{tpu_custom_call.1} parent=1 // pred_check_branch
      %121 = sbr.rel (%p119) target = $region29
    $region28: #{tpu_custom_call.1} parent=1 // pred_region
      %v122 = vlaneseq
      %v123 = vshrl.u32 %v122, 7
      %v124 = vadd.s32 %v123, 8
      %v125 = vlaneseq
      %v126 = vand.u32 %v125, 127
      %v127 = vmul.u32 %v123, 128
      %v128 = vmul.u32 %v124, 128
      %v129 = vstv %s108
      %v130 = vadd.s32 %v129, %v127
      %v131 = vadd.s32 %v129, %v128
      %v132 = vadd.s32 %v130, %v126
      %v133 = vadd.s32 %v131, %v126
      %vm134 = vcmp.lt.s32.totalorder %v132, 2048
      %vm135 = vcmp.lt.s32.totalorder %v133, 2048
      %v136 = vsel %vm134, %v105, 0.0
      %v137 = vsel %vm135, %v106, 0.0
      %v138 = vld [vmem:[#allocation2] sm:$0xff]
      %v139 = vadd.f32 %v136, %v137
      %v140 = vadd.f32 %v138, %v139
      %141 = vst [vmem:[#allocation2] sm:$0xff] %v140
    $region29: #{tpu_custom_call.1} parent=1 // pred_fallthru
      _
    // Predicated region
    $region30: #{tpu_custom_call.1} parent=1 // pred_check
      %p142 = pneg %p64
    $region31: #{tpu_custom_call.1} parent=1 // pred_check_branch
      %144 = sbr.rel (%p142) target = $region33
    $region32: #{tpu_custom_call.1} parent=1 // pred_region
      %v145 = vld [vmem:[#allocation2] sm:$0xff]
      %146 = vadd.xlane.f32.xlu0 %v145
      %v147 = vpop.xlane.xlu0 %146
      %v148 = vrot.slane %v147, 4
      %v149 = vadd.f32 %v147, %v148
      %v150 = vrot.slane %v149, 2
      %v151 = vadd.f32 %v149, %v150
      %v152 = vrot.slane %v151, 1
      %v153 = vadd.f32 %v151, %v152
      %s154 = vtos %v153
      %s155 = scalar_lea.smem [#allocation8], 0
      %156 = sst [smem:[%s155]] %s154
    $region33: #{tpu_custom_call.1} parent=1 // pred_fallthru
      _
    // Predicated region
    $region34: #{tpu_custom_call.1} parent=1 // pred_check
      _
    $region35: #{tpu_custom_call.1} parent=1 // pred_check_branch
      %158 = sbr.rel (0) target = $region37
    $region36: #{tpu_custom_call.1} parent=1 // pred_region
      %160 = vsyncadd [#allocation5], 0
      %s162 = sshll.u32 %s2, 4
      %s163 = int_to_ptr.hbm [resolvable:$true] %s162
      %165 = dma.smem_to_hbm [#allocation8], 16, %s163, [#allocation5]
    $region37: #{tpu_custom_call.1} parent=1 // pred_fallthru
      _
    // Predicated region
    $region38: #{tpu_custom_call.1} parent=1 // pred_check
      _
    $region39: #{tpu_custom_call.1} parent=1 // pred_check_branch
      %167 = sbr.rel (0) target = $region41
    $region40: #{tpu_custom_call.1} parent=1 // pred_region
      %169 = dma.done [#allocation5], 16
    $region41: #{tpu_custom_call.1} parent=1 // pred_fallthru
      _
    %170 = sfence
    %171 = vsyncpa [#allocation4], 1
    %172 = vsyncpa [#allocation7], 1
    %173 = vsyncpa [#allocation5], 1

</llo_original>
